<compile_context>
chip_gen: v5e
topology: v5e:2x2
jax: 0.10.0
libtpu: 0.0.40
codegen_flags: <defaults>
</compile_context>

<pallas_src>
import functools

import jax
import jax.numpy as jnp
from jax.experimental import pallas as pl
from jax.experimental.pallas import tpu as pltpu


_ACTS = {
    "none": lambda x: x,
    "relu": lambda x: jnp.maximum(x, 0.0),
    "elu": jax.nn.elu,
    "tanh": jnp.tanh,
    "mish": lambda x: x * jnp.tanh(jax.nn.softplus(x)),
}


def _round_up(x, m):
    return ((x + m - 1) // m) * m


def _gru_fused2_kernel(x_ref, h_ref, wx_ref, wh_ref, b_ref, out_ref, *, act, s_pad):
    """Two MXU matmuls per batch tile (x-part + h-part), f32 accumulation."""
    h = h_ref[...]                                           # [TM, Sp]
    parts = (
        jnp.dot(x_ref[...].astype(wx_ref.dtype), wx_ref[...],
                preferred_element_type=jnp.float32)
        + jnp.dot(h.astype(wh_ref.dtype), wh_ref[...],
                  preferred_element_type=jnp.float32)
        + b_ref[...]                                         # [1, 3*Sp] broadcast
    )                                                        # [TM, 3*Sp]
    reset = jax.nn.sigmoid(parts[:, :s_pad])
    cand = _ACTS[act](reset * parts[:, s_pad:2 * s_pad])
    update = jax.nn.sigmoid(parts[:, 2 * s_pad:])            # update_bias folded
    hf = h.astype(jnp.float32)
    out_ref[...] = (hf + update * (cand - hf)).astype(out_ref.dtype)


def _gru_fused1_kernel(x_ref, h_ref, w_ref, b_ref, out_ref, xh_ref, *,
                       act, s_pad, d):
    """Single MXU matmul per batch tile via a lane-aligned in-VMEM concat."""
    xh_ref[:, :d] = x_ref[...].astype(xh_ref.dtype)          # D % 128 == 0
    xh_ref[:, d:] = h_ref[...].astype(xh_ref.dtype)
    parts = jnp.dot(xh_ref[...], w_ref[...],
                    preferred_element_type=jnp.float32) + b_ref[...]
    reset = jax.nn.sigmoid(parts[:, :s_pad])
    cand = _ACTS[act](reset * parts[:, s_pad:2 * s_pad])
    update = jax.nn.sigmoid(parts[:, 2 * s_pad:])
    hf = h_ref[...].astype(jnp.float32)
    out_ref[...] = (hf + update * (cand - hf)).astype(out_ref.dtype)


def _physical_vmem_bytes():
    try:
        return int(pltpu.get_tpu_info().vmem_capacity_bytes)
    except Exception:  # budget heuristic only; conservative v7x default.
        return 64 << 20


def gru_cell_forward(inputs, state, weight_t, bias, *, update_bias=-1.0,
                     act="tanh", matmul_dtype=None, donate_state=False):
    """inputs: [B, D], state: [B, S], weight_t: [D+S, 3S] (torch weight.T),
    bias: [3S]. Returns (output, output) with output: [B, S]."""
    B, D = inputs.shape
    S = state.shape[-1]
    assert weight_t.shape == (D + S, 3 * S)
    assert bias.size == 3 * S

    Sp = _round_up(S, 128)                   # lane-dense gate width
    out_dtype = state.dtype
    mm_dtype = matmul_dtype if matmul_dtype is not None else weight_t.dtype

    # --- host-side parameter prep (done once per parameter set) -------------
    w3 = weight_t.reshape(D + S, 3, S)                       # gate-major columns
    if Sp != S:
        w3 = jnp.pad(w3, ((0, 0), (0, 0), (0, Sp - S)))      # pad each gate's lanes
    wx2 = w3[:D].reshape(D, 3 * Sp)                          # [D, 3*Sp]
    wh = w3[D:]                                              # [S, 3, Sp]
    if Sp != S:
        wh = jnp.pad(wh, ((0, Sp - S), (0, 0), (0, 0)))      # pad contraction rows
    wh2 = wh.reshape(Sp, 3 * Sp)                             # [Sp, 3*Sp]

    b3 = bias.reshape(3, S).astype(jnp.float32)
    b3 = b3.at[2].add(jnp.float32(update_bias))              # fold update_bias
    if Sp != S:
        b3 = jnp.pad(b3, ((0, 0), (0, Sp - S)))
    b2 = b3.reshape(1, 3 * Sp)

    concat_path = (D % 128 == 0)
    if concat_path:
        w_full = jnp.concatenate([wx2, wh2], axis=0).astype(mm_dtype)  # [D+Sp, 3Sp]
        param_arrays = (w_full, b2)
    else:
        param_arrays = (wx2.astype(mm_dtype), wh2.astype(mm_dtype), b2)

    # --- activations ---------------------------------------------------------
    x = inputs.astype(mm_dtype) if matmul_dtype is not None else inputs
    h = state                                                # stays f32 for blend
    if Sp != S:
        h = jnp.pad(h, ((0, 0), (0, Sp - S)))

    # --- VMEM-aware batch tiling ---------------------------------------------
    budget = _physical_vmem_bytes() - (4 << 20)              # headroom
    param_bytes = sum(int(a.size) * a.dtype.itemsize for a in param_arrays)
    x_item = x.dtype.itemsize
    h_item = h.dtype.itemsize
    o_item = jnp.dtype(out_dtype).itemsize
    mm_item = jnp.dtype(mm_dtype).itemsize

    TM = min(512, _round_up(B, 8))
    while True:
        act_bytes = 2 * TM * (D * x_item + Sp * h_item + Sp * o_item)  # double-buffered
        scratch_bytes = TM * (D + Sp) * mm_item if concat_path else 0
        needed = param_bytes + act_bytes + scratch_bytes
        if needed <= budget or TM <= 8:
            break
        TM = max(8, _round_up(TM // 2, 8))
    # TODO(synk): if `needed` still exceeds the per-core budget (huge f32 weights
    # on v7x), add a 'parallel' lane-block grid axis over S (also engages the
    # second TensorCore at small batch) or force bf16 weights.
    vmem_limit = int(min(budget, max(32 << 20, needed + needed // 4 + (1 << 20))))

    Bp = _round_up(B, TM)
    if Bp != B:
        x = jnp.pad(x, ((0, Bp - B), (0, 0)))
        h = jnp.pad(h, ((0, Bp - B), (0, 0)))
    grid = (Bp // TM,)

    # --- specs ----------------------------------------------------------------
    tile_x = pl.BlockSpec((TM, D), lambda i: (i, 0))
    tile_h = pl.BlockSpec((TM, Sp), lambda i: (i, 0))
    tile_o = pl.BlockSpec((TM, Sp), lambda i: (i, 0))
    # Grid-invariant params: whole-array, VMEM-resident, single copy.
    vmem_whole = pl.BlockSpec(memory_space=pltpu.MemorySpace.VMEM)
    param_specs = [vmem_whole] * len(param_arrays)

    if concat_path:
        kernel = functools.partial(_gru_fused1_kernel, act=act, s_pad=Sp, d=D)
        scratch_shapes = [pltpu.VMEM((TM, D + Sp), mm_dtype)]
    else:
        kernel = functools.partial(_gru_fused2_kernel, act=act, s_pad=Sp)
        scratch_shapes = []

    # Optional state donation for scan-style use (caller must not reuse `state`).
    io_aliases = {1: 0} if donate_state else {}

    out = pl.pallas_call(
        kernel,
        out_shape=jax.ShapeDtypeStruct((Bp, Sp), out_dtype),
        grid=grid,
        in_specs=[tile_x, tile_h] + param_specs,
        out_specs=tile_o,
        scratch_shapes=scratch_shapes,
        input_output_aliases=io_aliases,
        compiler_params=pltpu.CompilerParams(
            dimension_semantics=("parallel",),                 # megacore on v7x
            vmem_limit_bytes=vmem_limit,
        ),
    )(x, h, *param_arrays)

    out = out[:B, :S]
    return out, out
    # TODO(synk): norm=True (LayerNorm over the 3S parts) branch not implemented.


def _reference(inputs, state, weight_t, bias, update_bias=-1.0, act="tanh"):
    """Pure-JAX reference matching the PyTorch module."""
    parts = jnp.concatenate([inputs, state], -1) @ weight_t + bias.reshape(1, -1)
    reset, cand, update = jnp.split(parts, 3, axis=-1)
    reset = jax.nn.sigmoid(reset)
    cand = _ACTS[act](reset * cand)
    update = jax.nn.sigmoid(update + update_bias)
    return update * cand + (1 - update) * state


if __name__ == "__main__":
    key = jax.random.PRNGKey(0)

    def make(B, D, S, k):
        k_x, k_h, k_w, k_b = jax.random.split(k, 4)
        inputs = jax.random.normal(k_x, (B, D), dtype=jnp.float32)
        state = jax.random.normal(k_h, (B, S), dtype=jnp.float32)
        bound = float(D + S) ** -0.5
        weight_t = jax.random.uniform(k_w, (D + S, 3 * S), jnp.float32, -bound, bound)
        bias = jax.random.uniform(k_b, (3 * S,), jnp.float32, -bound, bound)
        return inputs, state, weight_t, bias

    k1, k2, _ = jax.random.split(key, 3)

    # Path 1: D % 128 != 0 -> fused 2-matmul kernel, all f32 (matches reference).
    x1, h1, w1, b1 = make(8, 32, 32, k1)
    out1, new1 = gru_cell_forward(x1, h1, w1, b1, update_bias=-1.0, act="tanh")
    out1 = jax.block_until_ready(out1)
    ref1 = _reference(x1, h1, w1, b1, update_bias=-1.0, act="tanh")
    assert out1.shape == (8, 32) and new1.shape == (8, 32)
    assert jnp.allclose(out1, ref1, atol=3e-5, rtol=3e-5), "fused2 mismatch"

    # Path 2: D % 128 == 0 -> single-matmul in-VMEM concat kernel.
    x2, h2, w2, b2 = make(16, 128, 32, k2)
    out2, _ = gru_cell_forward(x2, h2, w2, b2, update_bias=-1.0, act="tanh")
    out2 = jax.block_until_ready(out2)
    ref2 = _reference(x2, h2, w2, b2, update_bias=-1.0, act="tanh")
    assert out2.shape == (16, 32)
    assert jnp.allclose(out2, ref2, atol=3e-5, rtol=3e-5), "fused1 mismatch"

    # Path 3: bf16 weights / f32 accumulation (HBM-roofline option on v5e/v6e/v7x).
    out3, _ = gru_cell_forward(x1, h1, w1, b1, update_bias=-1.0, act="tanh",
                               matmul_dtype=jnp.bfloat16)
    out3 = jax.block_until_ready(out3)
    assert jnp.allclose(out3, ref1, atol=5e-2, rtol=5e-2), "bf16 mismatch"

    print("KERNEL_OK")
</pallas_src>

<mosaic_0001>
module attributes {stable_mosaic.version = 11 : i64} {
  func.func @_gru_fused2_kernel(%arg0: i32, %arg1: memref<8x32xf32, #tpu.memory_space<vmem>>, %arg2: memref<8x128xf32, #tpu.memory_space<vmem>>, %arg3: memref<32x384xf32, #tpu.memory_space<vmem>>, %arg4: memref<128x384xf32, #tpu.memory_space<vmem>>, %arg5: memref<1x384xf32, #tpu.memory_space<vmem>>, %arg6: memref<8x128xf32, #tpu.memory_space<vmem>>) attributes {dimension_semantics = [#tpu.dimension_semantics<parallel>], iteration_bounds = array<i64: 1>, scalar_prefetch = 0 : i64, scratch_operands = 0 : i64, tpu.core_type = #tpu.core_type<tc>, window_params = [{transform_indices = @transform_0, window_bounds = array<i64: 8, 32>}, {transform_indices = @transform_1, window_bounds = array<i64: 8, 128>}, {pipeline_mode = #tpu.pipeline_mode<synchronous>, transform_indices = @transform_2, window_bounds = array<i64: 32, 384>}, {pipeline_mode = #tpu.pipeline_mode<synchronous>, transform_indices = @transform_3, window_bounds = array<i64: 128, 384>}, {pipeline_mode = #tpu.pipeline_mode<synchronous>, transform_indices = @transform_4, window_bounds = array<i64: 1, 384>}, {transform_indices = @transform_5, window_bounds = array<i64: 8, 128>}]} {
    %c0 = arith.constant 0 : index
    %c0_0 = arith.constant 0 : index
    %0 = vector.load %arg2[%c0, %c0_0] : memref<8x128xf32, #tpu.memory_space<vmem>>, vector<8x128xf32>
    %c0_1 = arith.constant 0 : index
    %c0_2 = arith.constant 0 : index
    %1 = vector.load %arg1[%c0_1, %c0_2] : memref<8x32xf32, #tpu.memory_space<vmem>>, vector<8x32xf32>
    %c0_3 = arith.constant 0 : index
    %c0_4 = arith.constant 0 : index
    %2 = vector.load %arg3[%c0_3, %c0_4] : memref<32x384xf32, #tpu.memory_space<vmem>>, vector<32x384xf32>
    %cst = arith.constant dense<0.000000e+00> : vector<8x384xf32>
    %3 = tpu.matmul %1, %2, %cst {dimension_numbers = #tpu.dot_dimension_numbers<[1], [0], [0], [1], [0, 0, 1, 1], [], []>} : vector<8x32xf32>, vector<32x384xf32>, vector<8x384xf32> -> vector<8x384xf32>
    %c0_5 = arith.constant 0 : index
    %c0_6 = arith.constant 0 : index
    %4 = vector.load %arg4[%c0_5, %c0_6] : memref<128x384xf32, #tpu.memory_space<vmem>>, vector<128x384xf32>
    %cst_7 = arith.constant dense<0.000000e+00> : vector<8x384xf32>
    %5 = tpu.matmul %0, %4, %cst_7 {dimension_numbers = #tpu.dot_dimension_numbers<[1], [0], [0], [1], [0, 0, 1, 1], [], []>} : vector<8x128xf32>, vector<128x384xf32>, vector<8x384xf32> -> vector<8x384xf32>
    %6 = arith.addf %3, %5 : vector<8x384xf32>
    %c0_8 = arith.constant 0 : index
    %c0_9 = arith.constant 0 : index
    %7 = vector.load %arg5[%c0_8, %c0_9] : memref<1x384xf32, #tpu.memory_space<vmem>>, vector<1x384xf32>
    %8 = vector.broadcast %7 : vector<1x384xf32> to vector<8x384xf32>
    %9 = arith.addf %6, %8 : vector<8x384xf32>
    %10 = vector.extract_strided_slice %9 {offsets = [0, 0], sizes = [8, 128], strides = [1, 1]} : vector<8x384xf32> to vector<8x128xf32>
    %11 = arith.negf %10 : vector<8x128xf32>
    %12 = math.exp %11 : vector<8x128xf32>
    %cst_10 = arith.constant 1.000000e+00 : f32
    %13 = vector.broadcast %cst_10 : f32 to vector<8x128xf32>
    %14 = arith.addf %13, %12 : vector<8x128xf32>
    %15 = arith.divf %13, %14 : vector<8x128xf32>
    %16 = vector.extract_strided_slice %9 {offsets = [0, 128], sizes = [8, 128], strides = [1, 1]} : vector<8x384xf32> to vector<8x128xf32>
    %17 = arith.mulf %15, %16 : vector<8x128xf32>
    %18 = math.tanh %17 : vector<8x128xf32>
    %19 = vector.extract_strided_slice %9 {offsets = [0, 256], sizes = [8, 128], strides = [1, 1]} : vector<8x384xf32> to vector<8x128xf32>
    %20 = arith.negf %19 : vector<8x128xf32>
    %21 = math.exp %20 : vector<8x128xf32>
    %cst_11 = arith.constant 1.000000e+00 : f32
    %22 = vector.broadcast %cst_11 : f32 to vector<8x128xf32>
    %23 = arith.addf %22, %21 : vector<8x128xf32>
    %24 = arith.divf %22, %23 : vector<8x128xf32>
    %25 = arith.subf %18, %0 : vector<8x128xf32>
    %26 = arith.mulf %24, %25 : vector<8x128xf32>
    %27 = arith.addf %0, %26 : vector<8x128xf32>
    %c0_12 = arith.constant 0 : index
    %c0_13 = arith.constant 0 : index
    %28 = vector.load %arg6[%c0_12, %c0_13] : memref<8x128xf32, #tpu.memory_space<vmem>>, vector<8x128xf32>
    tpu.vector_store %arg6[%c0_12, %c0_13], %27 {strides = array<i32>} : memref<8x128xf32, #tpu.memory_space<vmem>>, vector<8x128xf32>,
    return
  }
  func.func @transform_0(%arg0: i32) -> (i32, i32) {
    %c0_i32 = arith.constant 0 : i32
    %c0_i32_0 = arith.constant 0 : i32
    return %arg0, %c0_i32 : i32, i32
  }
  func.func @transform_1(%arg0: i32) -> (i32, i32) {
    %c0_i32 = arith.constant 0 : i32
    %c0_i32_0 = arith.constant 0 : i32
    return %arg0, %c0_i32 : i32, i32
  }
  func.func @transform_2(%arg0: i32) -> (i32, i32) {
    %c0_i32 = arith.constant 0 : i32
    %c0_i32_0 = arith.constant 0 : i32
    %c0_i32_1 = arith.constant 0 : i32
    return %c0_i32, %c0_i32_0 : i32, i32
  }
  func.func @transform_3(%arg0: i32) -> (i32, i32) {
    %c0_i32 = arith.constant 0 : i32
    %c0_i32_0 = arith.constant 0 : i32
    %c0_i32_1 = arith.constant 0 : i32
    return %c0_i32, %c0_i32_0 : i32, i32
  }
  func.func @transform_4(%arg0: i32) -> (i32, i32) {
    %c0_i32 = arith.constant 0 : i32
    %c0_i32_0 = arith.constant 0 : i32
    %c0_i32_1 = arith.constant 0 : i32
    return %c0_i32, %c0_i32_0 : i32, i32
  }
  func.func @transform_5(%arg0: i32) -> (i32, i32) {
    %c0_i32 = arith.constant 0 : i32
    %c0_i32_0 = arith.constant 0 : i32
    return %arg0, %c0_i32 : i32, i32
  }
}

</mosaic_0001>

<llo_original>
// kernel: tpu_custom_call.1
$region0: #{tpu_custom_call.1}
  #allocation0 [shape = 'u32[]', space=smem, size = 0x4, offset = 0x4, fixed_abs, tag = 'smem constant byte address 0x4 - core index']
  #allocation1 [shape = 'u32[72,128]{1,0:T(1,128)}', space=vmem, size = 0x9000, scoped, tag = 'internal scratch']
  %s0 = inlined_call_operand.hbm [shape: f32[8,32], index: 0, kind: input, shape index: {}]
  %s1 = inlined_call_operand.hbm [shape: f32[8,128], index: 1, kind: input, shape index: {}]
  %s2 = inlined_call_operand.hbm [shape: f32[32,384], index: 2, kind: input, shape index: {}]
  %s3 = inlined_call_operand.hbm [shape: f32[128,384], index: 3, kind: input, shape index: {}]
  %s4 = inlined_call_operand.vmem [shape: f32[1,384], index: 4, kind: input, shape index: {}]
  %s5 = inlined_call_operand.hbm [shape: f32[8,128], index: 5, kind: output, shape index: {}]
  %s6 = sld [smem:[#allocation0]]
  $region46: #{tpu_custom_call.1} parent=0
    _
  %s8 = ssub.s32 1, %s6
  %s9 = scalar_select 0, %s8, %s6
  $region1: #{tpu_custom_call.1} parent=0
    #allocation2 [shape = 'u8[4096]{0}', space=vmem, size = 0x1000, scoped, tag = 'input window, operand 0, single buffered']
    #allocation3 [shape = 's32[1]{0}', space=sflag, size = 0x4, scoped, tag = 'scoped memory for tpu_custom_call.1']
    #allocation4 [shape = 's32[1]{0}', space=sflag, size = 0x4, scoped, tag = 'scoped memory for tpu_custom_call.1']
    #allocation5 [shape = 'u8[4096]{0}', space=vmem, size = 0x1000, scoped, tag = 'input window, operand 1, single buffered']
    #allocation6 [shape = 's32[1]{0}', space=sflag, size = 0x4, scoped, tag = 'scoped memory for tpu_custom_call.1']
    #allocation7 [shape = 'u8[49152]{0}', space=vmem, size = 0xc000, scoped, tag = 'input window, operand 2, single buffered']
    #allocation8 [shape = 'u8[196608]{0}', space=vmem, size = 0x30000, scoped, tag = 'input window, operand 3, single buffered']
    #allocation9 [shape = 's32[1]{0}', space=sflag, size = 0x4, scoped, tag = 'scoped memory for tpu_custom_call.1']
    #allocation10 [shape = 'u8[4096]{0}', space=vmem, size = 0x1000, scoped, tag = 'output window, operand 0, single buffered']
    %10 = vsyncpa [#allocation3], 0
    %11 = vsyncpa [#allocation6], 0
    %12 = vsyncpa [#allocation9], 0
    %13 = vsyncpa [#allocation4], 0
    // Predicated region
    $region2: #{tpu_custom_call.1} parent=1 // pred_check
      _
    $region3: #{tpu_custom_call.1} parent=1 // pred_check_branch
      %15 = sbr.rel (0) target = $region5
    $region4: #{tpu_custom_call.1} parent=1 // pred_region
      %17 = vsyncadd [#allocation3], 0
      %s19 = sshll.u32 %s0, 4
      %s20 = int_to_ptr.hbm [resolvable:$true] %s19
      %s21 = sshll.u32 [#allocation2], 4
      %s22 = int_to_ptr.vmem [resolvable:$true] %s21
      %24 = dma.hbm_to_vmem [thread:$0]  %s20, 128, %s22, [#allocation3]
    $region5: #{tpu_custom_call.1} parent=1 // pred_fallthru
      _
    // Predicated region
    $region6: #{tpu_custom_call.1} parent=1 // pred_check
      _
    $region7: #{tpu_custom_call.1} parent=1 // pred_check_branch
      %26 = sbr.rel (0) target = $region9
    $region8: #{tpu_custom_call.1} parent=1 // pred_region
      %28 = vsyncadd [#allocation6], 0
      %s30 = sshll.u32 %s1, 4
      %s31 = int_to_ptr.hbm [resolvable:$true] %s30
      %s32 = sshll.u32 [#allocation5], 4
      %s33 = int_to_ptr.vmem [resolvable:$true] %s32
      %35 = dma.hbm_to_vmem [thread:$0]  %s31, 128, %s33, [#allocation6]
    $region9: #{tpu_custom_call.1} parent=1 // pred_fallthru
      _
    // Predicated region
    $region10: #{tpu_custom_call.1} parent=1 // pred_check
      _
    $region11: #{tpu_custom_call.1} parent=1 // pred_check_branch
      %37 = sbr.rel (0) target = $region13
    $region12: #{tpu_custom_call.1} parent=1 // pred_region
      %39 = vsyncadd [#allocation6], 0
      %s40 = sshll.u32 %s2, 4
      %s41 = int_to_ptr.hbm [resolvable:$true] %s40
      %s42 = sshll.u32 [#allocation7], 4
      %s43 = int_to_ptr.vmem [resolvable:$true] %s42
      %48 = dma.hbm_to_vmem [thread:$0]  %s41, 1536, %s43, [#allocation6], 384, 384, 24
    $region13: #{tpu_custom_call.1} parent=1 // pred_fallthru
      _
    // Predicated region
    $region14: #{tpu_custom_call.1} parent=1 // pred_check
      _
    $region15: #{tpu_custom_call.1} parent=1 // pred_check_branch
      %50 = sbr.rel (0) target = $region17
    $region16: #{tpu_custom_call.1} parent=1 // pred_region
      %52 = vsyncadd [#allocation9], 0
      %s53 = sshll.u32 %s3, 4
      %s54 = int_to_ptr.hbm [resolvable:$true] %s53
      %s55 = sshll.u32 [#allocation8], 4
      %s56 = int_to_ptr.vmem [resolvable:$true] %s55
      %61 = dma.hbm_to_vmem [thread:$0]  %s54, 6144, %s56, [#allocation9], 384, 384, 24
    $region17: #{tpu_custom_call.1} parent=1 // pred_fallthru
      _
    // Predicated region
    $region18: #{tpu_custom_call.1} parent=1 // pred_check
      _
    $region19: #{tpu_custom_call.1} parent=1 // pred_check_branch
      %63 = sbr.rel (0) target = $region21
    $region20: #{tpu_custom_call.1} parent=1 // pred_region
      _
    $region21: #{tpu_custom_call.1} parent=1 // pred_fallthru
      _
    // Predicated region
    $region22: #{tpu_custom_call.1} parent=1 // pred_check
      _
    $region23: #{tpu_custom_call.1} parent=1 // pred_check_branch
      %65 = sbr.rel (0) target = $region25
    $region24: #{tpu_custom_call.1} parent=1 // pred_region
      %67 = dma.done [#allocation3], 128
    $region25: #{tpu_custom_call.1} parent=1 // pred_fallthru
      _
    // Predicated region
    $region26: #{tpu_custom_call.1} parent=1 // pred_check
      _
    $region27: #{tpu_custom_call.1} parent=1 // pred_check_branch
      %69 = sbr.rel (0) target = $region29
    $region28: #{tpu_custom_call.1} parent=1 // pred_region
      %71 = dma.done [#allocation6], 128
    $region29: #{tpu_custom_call.1} parent=1 // pred_fallthru
      _
    // Predicated region
    $region30: #{tpu_custom_call.1} parent=1 // pred_check
      _
    $region31: #{tpu_custom_call.1} parent=1 // pred_check_branch
      %73 = sbr.rel (0) target = $region33
    $region32: #{tpu_custom_call.1} parent=1 // pred_region
      %75 = dma.done [#allocation6], 1536
    $region33: #{tpu_custom_call.1} parent=1 // pred_fallthru
      _
    // Predicated region
    $region34: #{tpu_custom_call.1} parent=1 // pred_check
      _
    $region35: #{tpu_custom_call.1} parent=1 // pred_check_branch
      %77 = sbr.rel (0) target = $region37
    $region36: #{tpu_custom_call.1} parent=1 // pred_region
      %79 = dma.done [#allocation9], 6144
    $region37: #{tpu_custom_call.1} parent=1 // pred_fallthru
      _
    %v80 = vld [vmem:[#allocation5] sm:$0xff]
    %v81 = vld [vmem:[#allocation2] sm:$0xff]
    %v82 = vld [vmem:[#allocation7] sm:$0xff]
    %v83 = vld [vmem:[#allocation7 + $0x8] sm:$0xff]
    %v84 = vld [vmem:[#allocation7 + $0x10] sm:$0xff]
    %v85 = vld [vmem:[#allocation7 + $0x18] sm:$0xff]
    %v86 = vld [vmem:[#allocation7 + $0x20] sm:$0xff]
    %v87 = vld [vmem:[#allocation7 + $0x28] sm:$0xff]
    %v88 = vld [vmem:[#allocation7 + $0x30] sm:$0xff]
    %v89 = vld [vmem:[#allocation7 + $0x38] sm:$0xff]
    %v90 = vld [vmem:[#allocation7 + $0x40] sm:$0xff]
    %v91 = vld [vmem:[#allocation7 + $0x48] sm:$0xff]
    %v92 = vld [vmem:[#allocation7 + $0x50] sm:$0xff]
    %v93 = vld [vmem:[#allocation7 + $0x58] sm:$0xff]
    %v94 = vld [vmem:[#allocation8] sm:$0xff]
    %v95 = vld [vmem:[#allocation8 + $0x8] sm:$0xff]
    %v96 = vld [vmem:[#allocation8 + $0x10] sm:$0xff]
    %v97 = vld [vmem:[#allocation8 + $0x18] sm:$0xff]
    %v98 = vld [vmem:[#allocation8 + $0x20] sm:$0xff]
    %v99 = vld [vmem:[#allocation8 + $0x28] sm:$0xff]
    %v100 = vld [vmem:[#allocation8 + $0x30] sm:$0xff]
    %v101 = vld [vmem:[#allocation8 + $0x38] sm:$0xff]
    %v102 = vld [vmem:[#allocation8 + $0x40] sm:$0xff]
    %v103 = vld [vmem:[#allocation8 + $0x48] sm:$0xff]
    %v104 = vld [vmem:[#allocation8 + $0x50] sm:$0xff]
    %v105 = vld [vmem:[#allocation8 + $0x58] sm:$0xff]
    %v106 = vld [vmem:[#allocation8 + $0x60] sm:$0xff]
    %v107 = vld [vmem:[#allocation8 + $0x68] sm:$0xff]
    %v108 = vld [vmem:[#allocation8 + $0x70] sm:$0xff]
    %v109 = vld [vmem:[#allocation8 + $0x78] sm:$0xff]
    %v110 = vld [vmem:[#allocation8 + $0x80] sm:$0xff]
    %v111 = vld [vmem:[#allocation8 + $0x88] sm:$0xff]
    %v112 = vld [vmem:[#allocation8 + $0x90] sm:$0xff]
    %v113 = vld [vmem:[#allocation8 + $0x98] sm:$0xff]
    %v114 = vld [vmem:[#allocation8 + $0xa0] sm:$0xff]
    %v115 = vld [vmem:[#allocation8 + $0xa8] sm:$0xff]
    %v116 = vld [vmem:[#allocation8 + $0xb0] sm:$0xff]
    %v117 = vld [vmem:[#allocation8 + $0xb8] sm:$0xff]
    %v118 = vld [vmem:[#allocation8 + $0xc0] sm:$0xff]
    %v119 = vld [vmem:[#allocation8 + $0xc8] sm:$0xff]
    %v120 = vld [vmem:[#allocation8 + $0xd0] sm:$0xff]
    %v121 = vld [vmem:[#allocation8 + $0xd8] sm:$0xff]
    %v122 = vld [vmem:[#allocation8 + $0xe0] sm:$0xff]
    %v123 = vld [vmem:[#allocation8 + $0xe8] sm:$0xff]
    %v124 = vld [vmem:[#allocation8 + $0xf0] sm:$0xff]
    %v125 = vld [vmem:[#allocation8 + $0xf8] sm:$0xff]
    %v126 = vld [vmem:[#allocation8 + $0x100] sm:$0xff]
    %v127 = vld [vmem:[#allocation8 + $0x108] sm:$0xff]
    %v128 = vld [vmem:[#allocation8 + $0x110] sm:$0xff]
    %v129 = vld [vmem:[#allocation8 + $0x118] sm:$0xff]
    %v130 = vld [vmem:[#allocation8 + $0x120] sm:$0xff]
    %v131 = vld [vmem:[#allocation8 + $0x128] sm:$0xff]
    %v132 = vld [vmem:[#allocation8 + $0x130] sm:$0xff]
    %v133 = vld [vmem:[#allocation8 + $0x138] sm:$0xff]
    %v134 = vld [vmem:[#allocation8 + $0x140] sm:$0xff]
    %v135 = vld [vmem:[#allocation8 + $0x148] sm:$0xff]
    %v136 = vld [vmem:[#allocation8 + $0x150] sm:$0xff]
    %v137 = vld [vmem:[#allocation8 + $0x158] sm:$0xff]
    %v138 = vld [vmem:[#allocation8 + $0x160] sm:$0xff]
    %v139 = vld [vmem:[#allocation8 + $0x168] sm:$0xff]
    %v140 = vld [vmem:[#allocation8 + $0x170] sm:$0xff]
    %v141 = vld [vmem:[#allocation8 + $0x178] sm:$0xff]
    %142 = vmatpush.msra.mxu0 %v139
    %143 = vmatpush.msra.mxu0 %v136
    %144 = vmatpush.msra.mxu0 %v133
    %145 = vmatpush.msra.mxu0 %v130
    %146 = vmatpush.msra.mxu0 %v127
    %147 = vmatpush.msra.mxu0 %v124
    %148 = vmatpush.msra.mxu0 %v121
    %149 = vmatpush.msra.mxu0 %v118
    %150 = vmatpush.msra.mxu0 %v115
    %151 = vmatpush.msra.mxu0 %v112
    %152 = vmatpush.msra.mxu0 %v109
    %153 = vmatpush.msra.mxu0 %v106
    %154 = vmatpush.msra.mxu0 %v103
    %155 = vmatpush.msra.mxu0 %v100
    %156 = vmatpush.msra.mxu0 %v97
    %157 = vmatpush.msra.mxu0 %v94
    %158 = vmatmul.f32.gmra.mxu0 %v80
    %v159 = vpop.f32.mrf.mxu0
    %v160 = vadd.f32 0.0, %v159
    %161 = vdwg.mxu0
    %162 = vmatpush.msra.mxu0 %v140
    %163 = vmatpush.msra.mxu0 %v137
    %164 = vmatpush.msra.mxu0 %v134
    %165 = vmatpush.msra.mxu0 %v131
    %166 = vmatpush.msra.mxu0 %v128
    %167 = vmatpush.msra.mxu0 %v125
    %168 = vmatpush.msra.mxu0 %v122
    %169 = vmatpush.msra.mxu0 %v119
    %170 = vmatpush.msra.mxu0 %v116
    %171 = vmatpush.msra.mxu0 %v113
    %172 = vmatpush.msra.mxu0 %v110
    %173 = vmatpush.msra.mxu0 %v107
    %174 = vmatpush.msra.mxu0 %v104
    %175 = vmatpush.msra.mxu0 %v101
    %176 = vmatpush.msra.mxu0 %v98
    %177 = vmatpush.msra.mxu0 %v95
    %178 = vmatmul.f32.gmra.mxu0 %v80
    %v179 = vpop.f32.mrf.mxu0
    %v180 = vadd.f32 0.0, %v179
    %181 = vdwg.mxu0
    %182 = vmatpush.msra.mxu0 %v141
    %183 = vmatpush.msra.mxu0 %v138
    %184 = vmatpush.msra.mxu0 %v135
    %185 = vmatpush.msra.mxu0 %v132
    %186 = vmatpush.msra.mxu0 %v129
    %187 = vmatpush.msra.mxu0 %v126
    %188 = vmatpush.msra.mxu0 %v123
    %189 = vmatpush.msra.mxu0 %v120
    %190 = vmatpush.msra.mxu0 %v117
    %191 = vmatpush.msra.mxu0 %v114
    %192 = vmatpush.msra.mxu0 %v111
    %193 = vmatpush.msra.mxu0 %v108
    %194 = vmatpush.msra.mxu0 %v105
    %195 = vmatpush.msra.mxu0 %v102
    %196 = vmatpush.msra.mxu0 %v99
    %197 = vmatpush.msra.mxu0 %v96
    %198 = vmatmul.f32.gmra.mxu0 %v80
    %v199 = vpop.f32.mrf.mxu0
    %v200 = vadd.f32 0.0, %v199
    %201 = vdwg.mxu0
    %vm202 = vcmask 261120
    %v204 = vsel %vm202, %v81, 0
    %206 = vmatpush.msra.mxu0 0.0
    %207 = vmatpush.msra.mxu0 0.0
    %208 = vmatpush.msra.mxu0 0.0
    %209 = vmatpush.msra.mxu0 0.0
    %210 = vmatpush.msra.mxu0 0.0
    %211 = vmatpush.msra.mxu0 0.0
    %212 = vmatpush.msra.mxu0 0.0
    %213 = vmatpush.msra.mxu0 0.0
    %214 = vmatpush.msra.mxu0 0.0
    %215 = vmatpush.msra.mxu0 0.0
    %216 = vmatpush.msra.mxu0 0.0
    %217 = vmatpush.msra.mxu0 0.0
    %218 = vmatpush.msra.mxu0 %v91
    %219 = vmatpush.msra.mxu0 %v88
    %220 = vmatpush.msra.mxu0 %v85
    %221 = vmatpush.msra.mxu0 %v82
    %222 = vmatmul.f32.gmra.mxu0 %v204
    %v223 = vpop.f32.mrf.mxu0
    %v224 = vadd.f32 %v160, %v223
    %225 = vdwg.mxu0
    %226 = vmatpush.msra.mxu0 0.0
    %227 = vmatpush.msra.mxu0 0.0
    %228 = vmatpush.msra.mxu0 0.0
    %229 = vmatpush.msra.mxu0 0.0
    %230 = vmatpush.msra.mxu0 0.0
    %231 = vmatpush.msra.mxu0 0.0
    %232 = vmatpush.msra.mxu0 0.0
    %233 = vmatpush.msra.mxu0 0.0
    %234 = vmatpush.msra.mxu0 0.0
    %235 = vmatpush.msra.mxu0 0.0
    %236 = vmatpush.msra.mxu0 0.0
    %237 = vmatpush.msra.mxu0 0.0
    %238 = vmatpush.msra.mxu0 %v92
    %239 = vmatpush.msra.mxu0 %v89
    %240 = vmatpush.msra.mxu0 %v86
    %241 = vmatpush.msra.mxu0 %v83
    %242 = vmatmul.f32.gmra.mxu0 %v204
    %v243 = vpop.f32.mrf.mxu0
    %v244 = vadd.f32 %v180, %v243
    %245 = vdwg.mxu0
    %246 = vmatpush.msra.mxu0 0.0
    %247 = vmatpush.msra.mxu0 0.0
    %248 = vmatpush.msra.mxu0 0.0
    %249 = vmatpush.msra.mxu0 0.0
    %250 = vmatpush.msra.mxu0 0.0
    %251 = vmatpush.msra.mxu0 0.0
    %252 = vmatpush.msra.mxu0 0.0
    %253 = vmatpush.msra.mxu0 0.0
    %254 = vmatpush.msra.mxu0 0.0
    %255 = vmatpush.msra.mxu0 0.0
    %256 = vmatpush.msra.mxu0 0.0
    %257 = vmatpush.msra.mxu0 0.0
    %258 = vmatpush.msra.mxu0 %v93
    %259 = vmatpush.msra.mxu0 %v90
    %260 = vmatpush.msra.mxu0 %v87
    %261 = vmatpush.msra.mxu0 %v84
    %262 = vmatmul.f32.gmra.mxu0 %v204
    %v263 = vpop.f32.mrf.mxu0
    %v264 = vadd.f32 %v200, %v263
    %265 = vdwg.mxu0
    %v266 = vld [vmem:[%s4] sm:$0x7]
    %v268 = vperm.slane %v266, 0
    %v269 = vperm.slane %v266, 1
    %v270 = vperm.slane %v266, 2
    %v274 = vadd.f32 %v224, %v268
    %v275 = vadd.f32 %v244, %v269
    %v276 = vadd.f32 %v264, %v270
    %v277 = vxor.u32 %v274, 2147483648
    %v278 = vmul.f32 %v277, 1.442695
    %v279 = vpow.pop %v278
    %v280 = vadd.f32 %v279, 1.0
    %v281 = vrcp.pop %v280
    %v282 = vmul.f32 %v280, %v281
    %v283 = vsub.f32 1.0, %v282
    %v284 = vmul.f32 %v281, %v283
    %v285 = vadd.f32 %v281, %v284
    %vm286 = vweird.f32 %v280
    %vm287 = vweird.f32 %v281
    %vm288 = vmor %vm286, %vm287
    %v289 = vsel %vm288, %v281, %v285
    %v290 = vand.u32 2147483647, %v280
    %vm291 = vcmp.eq.f32.partialorder %v290, 8.507059e+37
    %v292 = vand.u32 %v280, 2147483648
    %v293 = vor.u32 1.1754944e-38, %v292
    %v294 = vsel %vm291, %v293, %v289
    %v295 = vmul.f32 1.0, %v294
    %v296 = vmul.f32 %v295, %v275
    %v297 = vtanh.pop %v296
    %v298 = vxor.u32 %v276, 2147483648
    %v299 = vmul.f32 %v298, 1.442695
    %v300 = vpow.pop %v299
    %v301 = vadd.f32 %v300, 1.0
    %v302 = vrcp.pop %v301
    %v303 = vmul.f32 %v301, %v302
    %v304 = vsub.f32 1.0, %v303
    %v305 = vmul.f32 %v302, %v304
    %v306 = vadd.f32 %v302, %v305
    %vm307 = vweird.f32 %v301
    %vm308 = vweird.f32 %v302
    %vm309 = vmor %vm307, %vm308
    %v310 = vsel %vm309, %v302, %v306
    %v311 = vand.u32 2147483647, %v301
    %vm312 = vcmp.eq.f32.partialorder %v311, 8.507059e+37
    %v313 = vand.u32 %v301, 2147483648
    %v314 = vor.u32 1.1754944e-38, %v313
    %v315 = vsel %vm312, %v314, %v310
    %v316 = vmul.f32 1.0, %v315
    %v317 = vsub.f32 %v297, %v80
    %v318 = vmul.f32 %v316, %v317
    %v319 = vadd.f32 %v80, %v318
    %320 = vst [vmem:[#allocation10] sm:$0xff] %v319
    // Predicated region
    $region38: #{tpu_custom_call.1} parent=1 // pred_check
      _
    $region39: #{tpu_custom_call.1} parent=1 // pred_check_branch
      %322 = sbr.rel (0) target = $region41
    $region40: #{tpu_custom_call.1} parent=1 // pred_region
      %324 = vsyncadd [#allocation4], 0
      %s326 = sshll.u32 [#allocation10], 4
      %s327 = int_to_ptr.vmem [resolvable:$true] %s326
      %s328 = sshll.u32 %s5, 4
      %s329 = int_to_ptr.hbm [resolvable:$true] %s328
      %331 = dma.vmem_to_hbm [thread:$0]  %s327, 128, %s329, [#allocation4]
    $region41: #{tpu_custom_call.1} parent=1 // pred_fallthru
      _
    // Predicated region
    $region42: #{tpu_custom_call.1} parent=1 // pred_check
      _
    $region43: #{tpu_custom_call.1} parent=1 // pred_check_branch
      %333 = sbr.rel (0) target = $region45
    $region44: #{tpu_custom_call.1} parent=1 // pred_region
      %335 = dma.done [#allocation4], 128
    $region45: #{tpu_custom_call.1} parent=1 // pred_fallthru
      _
    %336 = vsyncpa [#allocation3], 1
    %337 = vsyncpa [#allocation6], 1
    %338 = vsyncpa [#allocation9], 1
    %339 = vsyncpa [#allocation4], 1

</llo_original>
